<compile_context>
chip_gen: v7x
topology: tpu7x:2x2x1
jax: 0.10.0
libtpu: 0.0.40
codegen_flags: <defaults>
</compile_context>

<pallas_src>
import functools

import jax
import jax.numpy as jnp
from jax import lax
from jax.experimental import pallas as pl
from jax.experimental.pallas import tpu as pltpu


def _round_up(x: int, m: int) -> int:
    return ((x + m - 1) // m) * m


def _make_kernel(k_size: int, c_in_pad: int, tap_qr):
    """Builds the ConvBlock kernel body.

    x_ref:     (1, stride*C_in_pad, L_phase)   bf16, VMEM-resident per batch
    w_ref:     (K, C_out_tile, C_in_pad)       bf16, BN scale pre-folded
    shift_ref: (C_out_tile, 1)                 f32, folded bias/BN shift
    o_ref:     (1, C_out_tile, L_out_pad)      f32, NCL layout
    """

    def kernel(x_ref, w_ref, shift_ref, o_ref):
        tco = o_ref.shape[1]
        l_out_pad = o_ref.shape[2]
        acc = jnp.zeros((tco, l_out_pad), jnp.float32)
        # K is small -> fully unrolled; all slice starts are static.
        for kk, (q, r) in enumerate(tap_qr):
            x_sl = x_ref[0, r * c_in_pad:(r + 1) * c_in_pad, q:q + l_out_pad]
            acc = acc + jnp.dot(w_ref[kk], x_sl,
                                preferred_element_type=jnp.float32)
        y = acc + shift_ref[...]                      # folded bias + BN shift
        o_ref[0, :, :] = jnp.maximum(y, 0.0).astype(o_ref.dtype)

    return kernel


@functools.partial(jax.jit, static_argnames=("stride", "eps"))
def conv_block_forward(x, weight, bias, gamma, beta, running_mean, running_var,
                       *, stride, eps=1e-5):
    """Forward of ConvBlock: Conv1dSamePadding -> BatchNorm1d -> ReLU.

    x:      (N, C_in, L) float32, NCL layout (like torch Conv1d)
    weight: (C_out, C_in, K); bias/gamma/beta/running_mean/running_var: (C_out,)
    returns (N, C_out, L_out) float32
    """
    n, c_in, l_in = x.shape
    c_out, _, k = weight.shape

    # "same" padding exactly as Conv1dSamePadding (dilation=1, groups=1):
    # if total padding is odd, the extra zero goes on the right.
    pad_total = max((l_in - 1) * stride - l_in + k, 0)
    pad_left = pad_total // 2
    pad_right = pad_total - pad_left
    l_pad = l_in + pad_total
    l_out = (l_pad - k) // stride + 1

    # Fold conv bias + eval-mode BatchNorm1d into the weights (scale) and a
    # per-channel shift.
    # TODO(synk): training-mode BatchNorm (batch stats + running-stat update)
    # is not implemented; eval-mode running-stat semantics are used.
    scale = gamma / jnp.sqrt(running_var + eps)                 # (C_out,)
    shift = (bias - running_mean) * scale + beta                # (C_out,)
    w_scaled = weight * scale[:, None, None]                    # (C_out, C_in, K)

    # ---- padded / tiled dimensions -------------------------------------
    c_in_pad = _round_up(c_in, 16)          # bf16 sublane packing
    c_out_pad = _round_up(c_out, 8)
    if c_out_pad > 128:
        c_out_pad = _round_up(c_out_pad, 128)
        tco = 128
    else:
        tco = c_out_pad
    grid_co = c_out_pad // tco

    l_out_pad = _round_up(l_out, 128)       # lane-dense output
    q_max = (k - 1) // stride
    l_phase = _round_up(l_out_pad + q_max, 128)

    # ---- polyphase split of x (handles stride with static slices) -------
    #   x_ph[n, r*C_in_pad + c, m] = x_padded[n, c, m*stride + r]
    x_bf = x.astype(jnp.bfloat16)
    x_p = jnp.pad(x_bf, ((0, 0), (0, c_in_pad - c_in), (pad_left, pad_right)))
    target = stride * l_phase
    if target >= l_pad:
        x_p = jnp.pad(x_p, ((0, 0), (0, 0), (0, target - l_pad)))
    else:  # only unneeded tail positions can ever be dropped here
        x_p = x_p[:, :, :target]
    x_ph = x_p.reshape(n, c_in_pad, l_phase, stride)
    x_ph = jnp.transpose(x_ph, (0, 3, 1, 2)).reshape(n, stride * c_in_pad, l_phase)

    # ---- weights: (K, C_out_pad, C_in_pad), scale folded, bf16 -----------
    w_p = jnp.pad(w_scaled, ((0, c_out_pad - c_out), (0, c_in_pad - c_in), (0, 0)))
    w_arr = jnp.transpose(w_p, (2, 0, 1)).astype(jnp.bfloat16)  # (K, Co_pad, Ci_pad)

    shift_p = jnp.pad(shift, (0, c_out_pad - c_out)).reshape(c_out_pad, 1)
    shift_p = shift_p.astype(jnp.float32)

    # tap kk = q*stride + r  ->  x_padded[.., p*stride + kk] = phase r at (p + q)
    tap_qr = tuple(divmod(kk, stride) for kk in range(k))
    kernel = _make_kernel(k, c_in_pad, tap_qr)

    flops = 2 * n * c_out_pad * l_out_pad * c_in_pad * k
    bytes_accessed = (n * stride * c_in_pad * l_phase * 2 * grid_co   # x (bf16)
                      + k * c_out_pad * c_in_pad * 2                  # w (bf16)
                      + c_out_pad * 4                                 # shift
                      + n * c_out_pad * l_out_pad * 4)                # out (f32)

    out = pl.pallas_call(
        kernel,
        out_shape=jax.ShapeDtypeStruct((n, c_out_pad, l_out_pad), jnp.float32),
        grid=(n, grid_co),
        in_specs=[
            # x: resident per batch element (constant over the C_out axis).
            pl.BlockSpec((1, stride * c_in_pad, l_phase), lambda b, co: (b, 0, 0)),
            # weights / shift: stream per C_out tile.
            pl.BlockSpec((k, tco, c_in_pad), lambda b, co: (0, co, 0)),
            pl.BlockSpec((tco, 1), lambda b, co: (co, 0)),
        ],
        out_specs=pl.BlockSpec((1, tco, l_out_pad), lambda b, co: (b, co, 0)),
        compiler_params=pltpu.CompilerParams(
            dimension_semantics=("parallel", "parallel"),
            vmem_limit_bytes=32 * 1024 * 1024,
        ),
        cost_estimate=pl.CostEstimate(flops=flops, transcendentals=0,
                                      bytes_accessed=bytes_accessed),
    )(x_ph, w_arr, shift_p)

    # Trim the alignment padding; output is already NCL — no transpose needed.
    return out[:, :c_out, :l_out]


def _reference(x, weight, bias, gamma, beta, running_mean, running_var,
               *, stride, eps=1e-5):
    """Pure-JAX reference mirroring the PyTorch forward (eval-mode BN)."""
    c_out, _, k = weight.shape
    l_in = x.shape[2]
    pad_total = max((l_in - 1) * stride - l_in + k, 0)
    pad_left = pad_total // 2
    pad_right = pad_total - pad_left
    y = lax.conv_general_dilated(
        x, weight,
        window_strides=(stride,),
        padding=[(pad_left, pad_right)],
        dimension_numbers=("NCH", "OIH", "NCH"),
    ) + bias[None, :, None]
    inv = 1.0 / jnp.sqrt(running_var + eps)
    y = (y - running_mean[None, :, None]) * inv[None, :, None]
    y = y * gamma[None, :, None] + beta[None, :, None]
    return jnp.maximum(y, 0.0)


def _run_case(key, n, c_in, l, c_out, k, stride):
    ks = jax.random.split(key, 7)
    x = jax.random.normal(ks[0], (n, c_in, l), dtype=jnp.float32)
    weight = 0.1 * jax.random.normal(ks[1], (c_out, c_in, k), dtype=jnp.float32)
    bias = 0.1 * jax.random.normal(ks[2], (c_out,), dtype=jnp.float32)
    gamma = 1.0 + 0.1 * jax.random.normal(ks[3], (c_out,), dtype=jnp.float32)
    beta = 0.1 * jax.random.normal(ks[4], (c_out,), dtype=jnp.float32)
    running_mean = 0.1 * jax.random.normal(ks[5], (c_out,), dtype=jnp.float32)
    running_var = 1.0 + 0.5 * jax.random.uniform(ks[6], (c_out,), dtype=jnp.float32)

    out = conv_block_forward(x, weight, bias, gamma, beta, running_mean,
                             running_var, stride=stride)
    out = jax.block_until_ready(out)

    ref = _reference(x, weight, bias, gamma, beta, running_mean, running_var,
                     stride=stride)
    assert out.shape == ref.shape, (out.shape, ref.shape)
    max_err = float(jnp.max(jnp.abs(out - ref)))
    # bf16 MXU inputs with f32 accumulation -> slightly relaxed tolerance.
    assert jnp.allclose(out, ref, atol=2e-2, rtol=2e-2), max_err


if __name__ == "__main__":
    key = jax.random.PRNGKey(0)
    k1, k2 = jax.random.split(key, 2)

    # ConvBlock(in_channels=4, out_channels=8, kernel_size=3, stride=1),
    # x of shape (N=2, C_in=4, L=16).
    _run_case(k1, n=2, c_in=4, l=16, c_out=8, k=3, stride=1)

    # Strided / ragged case exercises the polyphase path and padding math.
    _run_case(k2, n=2, c_in=3, l=19, c_out=6, k=5, stride=2)

    print("KERNEL_OK")
</pallas_src>

<mosaic_0001>
module attributes {stable_mosaic.version = 11 : i64} {
  func.func @kernel(%arg0: i32, %arg1: i32, %arg2: memref<1x16x256xbf16, #tpu.memory_space<vmem>>, %arg3: memref<3x8x16xbf16, #tpu.memory_space<vmem>>, %arg4: memref<8x1xf32, #tpu.memory_space<vmem>>, %arg5: memref<1x8x128xf32, #tpu.memory_space<vmem>>) attributes {dimension_semantics = [#tpu.dimension_semantics<parallel>, #tpu.dimension_semantics<parallel>], iteration_bounds = array<i64: 2, 1>, scalar_prefetch = 0 : i64, scratch_operands = 0 : i64, tpu.core_type = #tpu.core_type<tc>, window_params = [{transform_indices = @transform_0, window_bounds = array<i64: 1, 16, 256>}, {transform_indices = @transform_1, window_bounds = array<i64: 3, 8, 16>}, {transform_indices = @transform_2, window_bounds = array<i64: 8, 1>}, {transform_indices = @transform_3, window_bounds = array<i64: 1, 8, 128>}]} {
    %cst = arith.constant 0.000000e+00 : f32
    %0 = vector.broadcast %cst : f32 to vector<8x128xf32>
    %c0 = arith.constant 0 : index
    %c0_0 = arith.constant 0 : index
    %c0_1 = arith.constant 0 : index
    %1 = vector.load %arg2[%c0, %c0_0, %c0_1] : memref<1x16x256xbf16, #tpu.memory_space<vmem>>, vector<1x16x128xbf16>
    %2 = vector.shape_cast %1 : vector<1x16x128xbf16> to vector<16x128xbf16>
    %c0_2 = arith.constant 0 : index
    %c0_3 = arith.constant 0 : index
    %c0_4 = arith.constant 0 : index
    %3 = vector.load %arg3[%c0_2, %c0_3, %c0_4] : memref<3x8x16xbf16, #tpu.memory_space<vmem>>, vector<1x8x16xbf16>
    %4 = vector.shape_cast %3 : vector<1x8x16xbf16> to vector<8x16xbf16>
    %cst_5 = arith.constant dense<0.000000e+00> : vector<8x128xf32>
    %5 = tpu.matmul %4, %2, %cst_5 {dimension_numbers = #tpu.dot_dimension_numbers<[1], [0], [0], [1], [0, 0, 1, 1], [], []>} : vector<8x16xbf16>, vector<16x128xbf16>, vector<8x128xf32> -> vector<8x128xf32>
    %6 = arith.addf %0, %5 : vector<8x128xf32>
    %c0_6 = arith.constant 0 : index
    %c0_7 = arith.constant 0 : index
    %c1 = arith.constant 1 : index
    %7 = vector.load %arg2[%c0_6, %c0_7, %c1] : memref<1x16x256xbf16, #tpu.memory_space<vmem>>, vector<1x16x128xbf16>
    %8 = vector.shape_cast %7 : vector<1x16x128xbf16> to vector<16x128xbf16>
    %c1_8 = arith.constant 1 : index
    %c0_9 = arith.constant 0 : index
    %c0_10 = arith.constant 0 : index
    %9 = vector.load %arg3[%c1_8, %c0_9, %c0_10] : memref<3x8x16xbf16, #tpu.memory_space<vmem>>, vector<1x8x16xbf16>
    %10 = vector.shape_cast %9 : vector<1x8x16xbf16> to vector<8x16xbf16>
    %cst_11 = arith.constant dense<0.000000e+00> : vector<8x128xf32>
    %11 = tpu.matmul %10, %8, %cst_11 {dimension_numbers = #tpu.dot_dimension_numbers<[1], [0], [0], [1], [0, 0, 1, 1], [], []>} : vector<8x16xbf16>, vector<16x128xbf16>, vector<8x128xf32> -> vector<8x128xf32>
    %12 = arith.addf %6, %11 : vector<8x128xf32>
    %c0_12 = arith.constant 0 : index
    %c0_13 = arith.constant 0 : index
    %c2 = arith.constant 2 : index
    %13 = vector.load %arg2[%c0_12, %c0_13, %c2] : memref<1x16x256xbf16, #tpu.memory_space<vmem>>, vector<1x16x128xbf16>
    %14 = vector.shape_cast %13 : vector<1x16x128xbf16> to vector<16x128xbf16>
    %c2_14 = arith.constant 2 : index
    %c0_15 = arith.constant 0 : index
    %c0_16 = arith.constant 0 : index
    %15 = vector.load %arg3[%c2_14, %c0_15, %c0_16] : memref<3x8x16xbf16, #tpu.memory_space<vmem>>, vector<1x8x16xbf16>
    %16 = vector.shape_cast %15 : vector<1x8x16xbf16> to vector<8x16xbf16>
    %cst_17 = arith.constant dense<0.000000e+00> : vector<8x128xf32>
    %17 = tpu.matmul %16, %14, %cst_17 {dimension_numbers = #tpu.dot_dimension_numbers<[1], [0], [0], [1], [0, 0, 1, 1], [], []>} : vector<8x16xbf16>, vector<16x128xbf16>, vector<8x128xf32> -> vector<8x128xf32>
    %18 = arith.addf %12, %17 : vector<8x128xf32>
    %c0_18 = arith.constant 0 : index
    %c0_19 = arith.constant 0 : index
    %19 = vector.load %arg4[%c0_18, %c0_19] : memref<8x1xf32, #tpu.memory_space<vmem>>, vector<8x1xf32>
    %20 = vector.broadcast %19 : vector<8x1xf32> to vector<8x128xf32>
    %21 = arith.addf %18, %20 : vector<8x128xf32>
    %cst_20 = arith.constant 0.000000e+00 : f32
    %22 = vector.broadcast %cst_20 : f32 to vector<8x128xf32>
    %23 = arith.maximumf %21, %22 : vector<8x128xf32>
    %c0_21 = arith.constant 0 : index
    %c0_22 = arith.constant 0 : index
    %c0_23 = arith.constant 0 : index
    %24 = vector.load %arg5[%c0_21, %c0_22, %c0_23] : memref<1x8x128xf32, #tpu.memory_space<vmem>>, vector<1x8x128xf32>
    %25 = vector.shape_cast %24 : vector<1x8x128xf32> to vector<8x128xf32>
    %26 = vector.shape_cast %23 : vector<8x128xf32> to vector<1x8x128xf32>
    tpu.vector_store %arg5[%c0_21, %c0_22, %c0_23], %26 {strides = array<i32>} : memref<1x8x128xf32, #tpu.memory_space<vmem>>, vector<1x8x128xf32>,
    return
  }
  func.func @transform_0(%arg0: i32, %arg1: i32) -> (i32, i32, i32) {
    %c0_i32 = arith.constant 0 : i32
    %c0_i32_0 = arith.constant 0 : i32
    %c0_i32_1 = arith.constant 0 : i32
    return %arg0, %c0_i32, %c0_i32_0 : i32, i32, i32
  }
  func.func @transform_1(%arg0: i32, %arg1: i32) -> (i32, i32, i32) {
    %c0_i32 = arith.constant 0 : i32
    %c0_i32_0 = arith.constant 0 : i32
    %c0_i32_1 = arith.constant 0 : i32
    return %c0_i32, %arg1, %c0_i32_0 : i32, i32, i32
  }
  func.func @transform_2(%arg0: i32, %arg1: i32) -> (i32, i32) {
    %c0_i32 = arith.constant 0 : i32
    %c0_i32_0 = arith.constant 0 : i32
    return %arg1, %c0_i32 : i32, i32
  }
  func.func @transform_3(%arg0: i32, %arg1: i32) -> (i32, i32, i32) {
    %c0_i32 = arith.constant 0 : i32
    %c0_i32_0 = arith.constant 0 : i32
    return %arg0, %arg1, %c0_i32 : i32, i32, i32
  }
}

</mosaic_0001>

<llo_original>
// kernel: conv_block_forward.1
$region0: #{conv_block_forward.1}
  #allocation0 [shape = 'u32[]', space=smem, size = 0x4, offset = 0x4, fixed_abs, tag = 'smem constant byte address 0x4 - core index']
  #allocation1 [shape = 'u32[144,128]{1,0:T(1,128)}', space=vmem, size = 0x12000, scoped, tag = 'internal scratch']
  %s0 = inlined_call_operand.vmem [shape: bf16[2,16,256], index: 0, kind: input, shape index: {}]
  %s1 = inlined_call_operand.vmem [shape: bf16[3,8,16], index: 1, kind: input, shape index: {}]
  %s2 = inlined_call_operand.vmem [shape: f32[8,1], index: 2, kind: input, shape index: {}]
  %s3 = inlined_call_operand.hbm [shape: f32[2,8,128], index: 3, kind: output, shape index: {}]
  %s4 = sld [smem:[#allocation0]]
  $region45: #{conv_block_forward.1} parent=0
    _
  %s6 = ssub.s32 1, %s4
  %s7 = scalar_select 0, %s6, %s4
  $region1: #{conv_block_forward.1} parent=0
    #allocation2 [shape = 'u8[8192]{0}', space=vmem, size = 0x2000, scoped, tag = 'output window, operand 0']
    #allocation3 [shape = 's32[2]{0}', space=sflag, size = 0x8, scoped, tag = 'scoped memory for conv_block_forward.1']
    %8 = vsyncpa [#allocation3], 0
    %s9 = scalar_lea.sflag [#allocation3], 1
    %10 = vsyncpa %s9, 0
    loop: start=0, step=1, limit=4
    $region2: #{conv_block_forward.1} parent=1 // loop_pre_header
      _
    $region3: #{conv_block_forward.1} parent=1 // loop_header
      %s12 = sphi 0, %s16
      %p13 = scmp.ge.s32.totalorder %s12, 4
      %s19 = sphi 0, %s31
      %s20 = sphi 0, %s27
      %s21 = sphi 0, %s19
      %s22 = sphi 0, %s20
      %s23 = sphi 0, %s21
      %s24 = sphi 0, %s22
      %s34 = sphi 0, %s36
      %s37 = sphi 0, %s34
      %s38 = sphi 0, %s37
      %s54 = sphi 0, %s38
      %s60 = sphi 0, %s62
      %s63 = sphi 0, %s60
      %s64 = sphi 0, %s63
      %s80 = sphi 0, %s64
      %s86 = sphi 0, %s88
      %s89 = sphi 0, %s86
      %s90 = sphi 0, %s89
      %s106 = sphi 0, %s90
      %s114 = sphi 0, %s116
      %s117 = sphi 0, %s114
      %s118 = sphi 0, %s117
      %s134 = sphi 0, %s118
    $region4: #{conv_block_forward.1} parent=1 // loop_header_branch
      %15 = sbr.rel (%p13) target = $region8
    $region5: #{conv_block_forward.1} parent=1 // loop_body
      %s17 = ssub.s32 %s12, 1
      %s18 = ssub.s32 %s12, 2
      %s25 = sadd.s32 1, %s20
      %p26 = scmp.ge.s32.totalorder %s25, 1
      %s27 = scalar_select %p26, 0, %s25
      %s28 = sadd.s32 1, %s19
      %s29 = scalar_select %p26, %s28, %s19
      %p30 = scmp.ge.s32.totalorder %s29, 2
      %s31 = scalar_select %p30, 0, %s29
      %s32 = ssub.s32 %s19, %s31
      %p33 = scmp.eq.s32.totalorder %s32, 0
      %s35 = sadd.s32 %s34, 1
      %s36 = scalar_select %p33, %s34, %s35
      %p39 = pneg %p33
      %p40 = scmp.eq.s32.totalorder %s12, 1
      %p41 = por %p39, %p40
      %p42 = scmp.ne.s32.totalorder %s34, %s37
      %p43 = scmp.eq.s32.totalorder %s12, 0
      %p44 = por %p42, %p43
      %p45 = scmp.ne.s32.totalorder %s34, %s37
      %p46 = scmp.eq.s32.totalorder %s17, 1
      %p47 = por %p45, %p46
      %p48 = scmp.ne.s32.totalorder %s37, %s38
      %p49 = scmp.eq.s32.totalorder %s17, 0
      %p50 = por %p48, %p49
      %p51 = scmp.ne.s32.totalorder %s37, %s38
      %p52 = scmp.eq.s32.totalorder %s18, 1
      %p53 = por %p51, %p52
      %p55 = scmp.ne.s32.totalorder %s38, %s54
      %p56 = scmp.eq.s32.totalorder %s18, 0
      %p57 = por %p55, %p56
      %s58 = ssub.s32 %s20, %s27
      %p59 = scmp.eq.s32.totalorder %s58, 0
      %s61 = sadd.s32 %s60, 1
      %s62 = scalar_select %p59, %s60, %s61
      %p65 = pneg %p59
      %p66 = scmp.eq.s32.totalorder %s12, 1
      %p67 = por %p65, %p66
      %p68 = scmp.ne.s32.totalorder %s60, %s63
      %p69 = scmp.eq.s32.totalorder %s12, 0
      %p70 = por %p68, %p69
      %p71 = scmp.ne.s32.totalorder %s60, %s63
      %p72 = scmp.eq.s32.totalorder %s17, 1
      %p73 = por %p71, %p72
      %p74 = scmp.ne.s32.totalorder %s63, %s64
      %p75 = scmp.eq.s32.totalorder %s17, 0
      %p76 = por %p74, %p75
      %p77 = scmp.ne.s32.totalorder %s63, %s64
      %p78 = scmp.eq.s32.totalorder %s18, 1
      %p79 = por %p77, %p78
      %p81 = scmp.ne.s32.totalorder %s64, %s80
      %p82 = scmp.eq.s32.totalorder %s18, 0
      %p83 = por %p81, %p82
      %s84 = ssub.s32 %s20, %s27
      %p85 = scmp.eq.s32.totalorder %s84, 0
      %s87 = sadd.s32 %s86, 1
      %s88 = scalar_select %p85, %s86, %s87
      %p91 = pneg %p85
      %p92 = scmp.eq.s32.totalorder %s12, 1
      %p93 = por %p91, %p92
      %p94 = scmp.ne.s32.totalorder %s86, %s89
      %p95 = scmp.eq.s32.totalorder %s12, 0
      %p96 = por %p94, %p95
      %p97 = scmp.ne.s32.totalorder %s86, %s89
      %p98 = scmp.eq.s32.totalorder %s17, 1
      %p99 = por %p97, %p98
      %p100 = scmp.ne.s32.totalorder %s89, %s90
      %p101 = scmp.eq.s32.totalorder %s17, 0
      %p102 = por %p100, %p101
      %p103 = scmp.ne.s32.totalorder %s89, %s90
      %p104 = scmp.eq.s32.totalorder %s18, 1
      %p105 = por %p103, %p104
      %p107 = scmp.ne.s32.totalorder %s90, %s106
      %p108 = scmp.eq.s32.totalorder %s18, 0
      %p109 = por %p107, %p108
      %s110 = ssub.s32 %s19, %s31
      %s111 = ssub.s32 %s20, %s27
      %s112 = sor.u32 %s110, %s111
      %p113 = scmp.eq.s32.totalorder %s112, 0
      %s115 = sadd.s32 %s114, 1
      %s116 = scalar_select %p113, %s114, %s115
      %p119 = pneg %p113
      %p120 = scmp.eq.s32.totalorder %s12, 1
      %p121 = por %p119, %p120
      %p122 = scmp.ne.s32.totalorder %s114, %s117
      %p123 = scmp.eq.s32.totalorder %s12, 0
      %p124 = por %p122, %p123
      %p125 = scmp.ne.s32.totalorder %s114, %s117
      %p126 = scmp.eq.s32.totalorder %s17, 1
      %p127 = por %p125, %p126
      %p128 = scmp.ne.s32.totalorder %s117, %s118
      %p129 = scmp.eq.s32.totalorder %s17, 0
      %p130 = por %p128, %p129
      %p131 = scmp.ne.s32.totalorder %s117, %s118
      %p132 = scmp.eq.s32.totalorder %s18, 1
      %p133 = por %p131, %p132
      %p135 = scmp.ne.s32.totalorder %s118, %s134
      %p136 = scmp.eq.s32.totalorder %s18, 0
      %p137 = por %p135, %p136
      %p138 = scmp.le.s32.totalorder 1, %s12
      %p139 = scmp.lt.s32.totalorder %s12, 3
      %p140 = pnand %p138, %p139
      %p141 = pneg %p140
      // Predicated region
      $region9: #{conv_block_forward.1} parent=5 // pred_check
        _
      $region10: #{conv_block_forward.1} parent=5 // pred_check_branch
        %143 = sbr.rel (%p140) target = $region12
      $region11: #{conv_block_forward.1} parent=5 // pred_region
        %s144 = ssub.s32 %s12, 1
        // Predicated region
        $region13: #{conv_block_forward.1} parent=11 // pred_check
          %p145 = pneg %p76
        $region14: #{conv_block_forward.1} parent=11 // pred_check_branch
          %147 = sbr.rel (%p145) target = $region16
        $region15: #{conv_block_forward.1} parent=11 // pred_region
          %p148 = scmp.lt.s32.totalorder %s22, 0
          %s149 = scalar_select %p148, %s22, 0
          %s150 = smul.addr %s149, 4
          %s151 = scalar_lea.vmem %s1, %s150
        $region16: #{conv_block_forward.1} parent=11 // pred_fallthru
          _
        // Predicated region
        $region17: #{conv_block_forward.1} parent=11 // pred_check
          %p152 = pneg %p102
        $region18: #{conv_block_forward.1} parent=11 // pred_check_branch
          %154 = sbr.rel (%p152) target = $region20
        $region19: #{conv_block_forward.1} parent=11 // pred_region
          %p155 = scmp.lt.s32.totalorder %s22, 0
          %s156 = scalar_select %p155, %s22, 0
          %s157 = smul.addr %s156, 8
          %s158 = scalar_lea.vmem %s2, %s157
        $region20: #{conv_block_forward.1} parent=11 // pred_fallthru
          _
      $region12: #{conv_block_forward.1} parent=5 // pred_fallthru
        _
      %p159 = scmp.lt.s32.totalorder %s12, 2
      // Predicated region
      $region21: #{conv_block_forward.1} parent=5 // pred_check
        %p160 = pneg %p159
      $region22: #{conv_block_forward.1} parent=5 // pred_check_branch
        %162 = sbr.rel (%p160) target = $region24
      $region23: #{conv_block_forward.1} parent=5 // pred_region
        // Predicated region
        $region25: #{conv_block_forward.1} parent=23 // pred_check
          %p163 = pneg %p44
        $region26: #{conv_block_forward.1} parent=23 // pred_check_branch
          %165 = sbr.rel (%p163) target = $region28
        $region27: #{conv_block_forward.1} parent=23 // pred_region
          %p166 = scmp.lt.s32.totalorder %s19, 1
          %s167 = scalar_select %p166, %s19, 1
          %s168 = smul.addr %s167, 4
          %s169 = smul.addr %s168, 4
          %s170 = scalar_lea.vmem %s0, %s169
        $region28: #{conv_block_forward.1} parent=23 // pred_fallthru
          _
      $region24: #{conv_block_forward.1} parent=5 // pred_fallthru
        _
      %p171 = scmp.le.s32.totalorder 1, %s12
      %p172 = scmp.lt.s32.totalorder %s12, 3
      %p173 = pnand %p171, %p172
      %p174 = pneg %p173
      // Predicated region
      $region29: #{conv_block_forward.1} parent=5 // pred_check
        _
      $region30: #{conv_block_forward.1} parent=5 // pred_check_branch
        %176 = sbr.rel (%p173) target = $region32
      $region31: #{conv_block_forward.1} parent=5 // pred_region
        %s177 = ssub.s32 %s12, 1
        %p178 = scmp.lt.s32.totalorder %s21, 1
        %s179 = scalar_select %p178, %s21, 1
        %s180 = smul.addr %s179, 4
        %s181 = smul.addr %s180, 4
        %s182 = scalar_lea.vmem %s0, %s181
        %p183 = pneg %p50
        %p184 = pneg %p47
        %p185 = scmp.lt.s32.totalorder %s22, 0
        %s186 = scalar_select %p185, %s22, 0
        %s187 = smul.addr %s186, 4
        %s188 = scalar_lea.vmem %s1, %s187
        %p189 = pneg %p76
        %p190 = pneg %p73
        %p191 = scmp.lt.s32.totalorder %s22, 0
        %s192 = scalar_select %p191, %s22, 0
        %s193 = smul.addr %s192, 8
        %s194 = scalar_lea.vmem %s2, %s193
        %p195 = pneg %p102
        %p196 = pneg %p99
        %p197 = pneg %p130
        %p198 = pneg %p127
        %s199 = sand.u32 %s117, 1
        %s200 = scalar_lea.sflag [#allocation3], %s199
        %s201 = sand.u32 %s117, 1
        %s202 = smul.addr %s201, 8
        %s203 = scalar_lea.vmem [#allocation2], %s202
        %p204 = scmp.lt.s32.totalorder %s21, 1
        %s205 = scalar_select %p204, %s21, 1
        %s206 = smul.addr %s205, 4
        %s207 = smul.addr %s206, 4
        %s208 = scalar_lea.vmem %s0, %s207
        %p209 = scmp.lt.s32.totalorder %s22, 0
        %s210 = scalar_select %p209, %s22, 0
        %s211 = smul.addr %s210, 4
        %s212 = scalar_lea.vmem %s1, %s211
        %p213 = scmp.lt.s32.totalorder %s22, 0
        %s214 = scalar_select %p213, %s22, 0
        %s215 = smul.addr %s214, 8
        %s216 = scalar_lea.vmem %s2, %s215
        %v218 = vld [vmem:[%s208] sm:$0xf]
        %v219 = vld [vmem:[%s208 + $0x8] sm:$0xf]
        %v220 = vld [vmem:[%s212] sm:$0xf]
        %v221 = vld [vmem:[%s208] sm:$0xff]
        %v222 = vld [vmem:[%s208 + $0x8] sm:$0xff]
        %s223 = scalar_lea.vmem %s212, 4
        %v224 = vld [vmem:[%s223] sm:$0xf]
        %v227 = vunpack.c.l.b16 %v221
        %v228 = vunpack.c.h.b16 %v221
        %v229 = vunpack.c.l.b16 %v222
        %v230 = vunpack.c.h.b16 %v222
        %v231 = vpack.c.b16 %v229, %v227
        %v232 = vpack.c.b16 %v230, %v228
        %233 = vrot.lane.b32.xlu0 %v231, 127
        %v234 = vpop.permute.xlu0 %233
        %235 = vrot.lane.b32.xlu0 %v232, 127
        %v236 = vpop.permute.xlu0 %235
        %vm237 = vcmask 1039360
        %v238 = vsel %vm237, %v234, %v236
        %vm240 = vcmask 130048
        %v242 = vsel %vm240, %v224, 0
        %244 = vmatprep.subr.bf16.mxu0 0
        %245 = vmatpush1.bf16.msra.mxu0 %v238
        %246 = vmatprep.subr.bf16.mxu0 0
        %247 = vmatpush1.bf16.msra.mxu0 0
        %248 = vmatprep.subr.bf16.mxu0 0
        %249 = vmatpush1.bf16.msra.mxu0 0
        %250 = vmatprep.subr.bf16.mxu0 0
        %251 = vmatpush1.bf16.msra.mxu0 0
        %252 = vmatprep.subr.bf16.mxu0 0
        %253 = vmatpush1.bf16.msra.mxu0 0
        %254 = vmatprep.subr.bf16.mxu0 0
        %255 = vmatpush1.bf16.msra.mxu0 0
        %256 = vmatprep.subr.bf16.mxu0 0
        %257 = vmatpush1.bf16.msra.mxu0 0
        %258 = vmatprep.subr.bf16.mxu0 0
        %259 = vmatpush1.bf16.msra.mxu0 0
        %260 = vmatprep.subr.bf16.mxu0 0
        %261 = vmatpush1.bf16.msra.mxu0 0
        %262 = vmatprep.subr.bf16.mxu0 0
        %263 = vmatpush1.bf16.msra.mxu0 0
        %264 = vmatprep.subr.bf16.mxu0 0
        %265 = vmatpush1.bf16.msra.mxu0 0
        %266 = vmatprep.subr.bf16.mxu0 0
        %267 = vmatpush1.bf16.msra.mxu0 0
        %268 = vmatprep.subr.bf16.mxu0 0
        %269 = vmatpush1.bf16.msra.mxu0 0
        %270 = vmatprep.subr.bf16.mxu0 0
        %271 = vmatpush1.bf16.msra.mxu0 0
        %272 = vmatprep.subr.bf16.mxu0 0
        %273 = vmatpush1.bf16.msra.mxu0 0
        %274 = vmatprep.subr.bf16.mxu0 0
        %275 = vmatpush1.bf16.msra.mxu0 0
        %276 = vmatprep.mubr.bf16.mxu0 0
        %277 = vmatmul.mubr.bf16.gmra.mrb[0].mxu0 %v242
        %v278 = vpop.f32.mrb[0].mxu0
        %v279 = vadd.f32 0.0, %v278
        %v280 = vpop.f32.mrb[0].mxu0
        %v281 = vpop.f32.mrb[0].mxu0
        %v282 = vpop.f32.mrb[0].mxu0
        %283 = vdwg.mxu0
        %v286 = vunpack.c.l.b16 %v218
        %v287 = vunpack.c.l.b16 %v219
        %v288 = vpack.c.b16 %v287, %v286
        %v291 = vsel %vm240, %v220, 0
        %293 = vmatprep.subr.bf16.mxu0 0
        %294 = vmatpush1.bf16.msra.mxu0 %v288
        %295 = vmatprep.subr.bf16.mxu0 0
        %296 = vmatpush1.bf16.msra.mxu0 0
        %297 = vmatprep.subr.bf16.mxu0 0
        %298 = vmatpush1.bf16.msra.mxu0 0
        %299 = vmatprep.subr.bf16.mxu0 0
        %300 = vmatpush1.bf16.msra.mxu0 0
        %301 = vmatprep.subr.bf16.mxu0 0
        %302 = vmatpush1.bf16.msra.mxu0 0
        %303 = vmatprep.subr.bf16.mxu0 0
        %304 = vmatpush1.bf16.msra.mxu0 0
        %305 = vmatprep.subr.bf16.mxu0 0
        %306 = vmatpush1.bf16.msra.mxu0 0
        %307 = vmatprep.subr.bf16.mxu0 0
        %308 = vmatpush1.bf16.msra.mxu0 0
        %309 = vmatprep.subr.bf16.mxu0 0
        %310 = vmatpush1.bf16.msra.mxu0 0
        %311 = vmatprep.subr.bf16.mxu0 0
        %312 = vmatpush1.bf16.msra.mxu0 0
        %313 = vmatprep.subr.bf16.mxu0 0
        %314 = vmatpush1.bf16.msra.mxu0 0
        %315 = vmatprep.subr.bf16.mxu0 0
        %316 = vmatpush1.bf16.msra.mxu0 0
        %317 = vmatprep.subr.bf16.mxu0 0
        %318 = vmatpush1.bf16.msra.mxu0 0
        %319 = vmatprep.subr.bf16.mxu0 0
        %320 = vmatpush1.bf16.msra.mxu0 0
        %321 = vmatprep.subr.bf16.mxu0 0
        %322 = vmatpush1.bf16.msra.mxu0 0
        %323 = vmatprep.subr.bf16.mxu0 0
        %324 = vmatpush1.bf16.msra.mxu0 0
        %325 = vmatprep.mubr.bf16.mxu0 0
        %326 = vmatmul.mubr.bf16.gmra.mrb[0].mxu0 %v291
        %v327 = vpop.f32.mrb[0].mxu0
        %v328 = vadd.f32 %v279, %v327
        %v329 = vpop.f32.mrb[0].mxu0
        %v330 = vpop.f32.mrb[0].mxu0
        %v331 = vpop.f32.mrb[0].mxu0
        %332 = vdwg.mxu0
        %s333 = scalar_lea.vmem %s212, 8
        %v334 = vld [vmem:[%s333] sm:$0xf]
        %335 = vrot.lane.b32.xlu0 %v231, 126
        %v336 = vpop.permute.xlu0 %335
        %337 = vrot.lane.b32.xlu0 %v232, 126
        %v338 = vpop.permute.xlu0 %337
        %vm339 = vcmask 1031168
        %v340 = vsel %vm339, %v336, %v338
        %v343 = vsel %vm240, %v334, 0
        %345 = vmatprep.subr.bf16.mxu0 0
        %346 = vmatpush1.bf16.msra.mxu0 %v340
        %347 = vmatprep.subr.bf16.mxu0 0
        %348 = vmatpush1.bf16.msra.mxu0 0
        %349 = vmatprep.subr.bf16.mxu0 0
        %350 = vmatpush1.bf16.msra.mxu0 0
        %351 = vmatprep.subr.bf16.mxu0 0
        %352 = vmatpush1.bf16.msra.mxu0 0
        %353 = vmatprep.subr.bf16.mxu0 0
        %354 = vmatpush1.bf16.msra.mxu0 0
        %355 = vmatprep.subr.bf16.mxu0 0
        %356 = vmatpush1.bf16.msra.mxu0 0
        %357 = vmatprep.subr.bf16.mxu0 0
        %358 = vmatpush1.bf16.msra.mxu0 0
        %359 = vmatprep.subr.bf16.mxu0 0
        %360 = vmatpush1.bf16.msra.mxu0 0
        %361 = vmatprep.subr.bf16.mxu0 0
        %362 = vmatpush1.bf16.msra.mxu0 0
        %363 = vmatprep.subr.bf16.mxu0 0
        %364 = vmatpush1.bf16.msra.mxu0 0
        %365 = vmatprep.subr.bf16.mxu0 0
        %366 = vmatpush1.bf16.msra.mxu0 0
        %367 = vmatprep.subr.bf16.mxu0 0
        %368 = vmatpush1.bf16.msra.mxu0 0
        %369 = vmatprep.subr.bf16.mxu0 0
        %370 = vmatpush1.bf16.msra.mxu0 0
        %371 = vmatprep.subr.bf16.mxu0 0
        %372 = vmatpush1.bf16.msra.mxu0 0
        %373 = vmatprep.subr.bf16.mxu0 0
        %374 = vmatpush1.bf16.msra.mxu0 0
        %375 = vmatprep.subr.bf16.mxu0 0
        %376 = vmatpush1.bf16.msra.mxu0 0
        %377 = vmatprep.mubr.bf16.mxu0 0
        %378 = vmatmul.mubr.bf16.gmra.mrb[0].mxu0 %v343
        %v379 = vpop.f32.mrb[0].mxu0
        %v380 = vadd.f32 0.0, %v379
        %v381 = vpop.f32.mrb[0].mxu0
        %v382 = vpop.f32.mrb[0].mxu0
        %v383 = vpop.f32.mrb[0].mxu0
        %384 = vdwg.mxu0
        %v385 = vadd.f32 %v328, %v380
        %v386 = vld [vmem:[%s216] sm:$0xff]
        %388 = vset.pattern.permute.xlu0 0
        %389 = vperm.xlu0 %388, %v386
        %v390 = vpop.permute.xlu0 %389
        %v392 = vadd.f32 %v385, %v390
        %v393 = vmax.f32 %v392, 0.0
        %394 = vst [vmem:[%s203] sm:$0xff] %v393
        %s395 = sand.u32 %s117, 1
        %s396 = scalar_lea.sflag [#allocation3], %s395
        %s397 = sand.u32 %s117, 1
        %s398 = smul.addr %s397, 8
        %s399 = scalar_lea.vmem [#allocation2], %s398
        // Predicated region
        $region33: #{conv_block_forward.1} parent=31 // pred_check
          %p400 = pneg %p127
        $region34: #{conv_block_forward.1} parent=31 // pred_check_branch
          %402 = sbr.rel (%p400) target = $region36
        $region35: #{conv_block_forward.1} parent=31 // pred_region
          %s404 = ssub.s32 128, 128
          %405 = vsyncadd %s396, %s404
          %s406 = sadd.s32 %s22, %s21
          %s407 = smul.addr %s406, 128
          %s408 = scalar_lea.hbm %s3, %s407
          %s410 = sshll.u32 %s399, 4
          %s411 = int_to_ptr.vmem [resolvable:$true] %s410
          %413 = dma.vmem_to_hbm [thread:$0]  %s411, 128, %s408, %s396
        $region36: #{conv_block_forward.1} parent=31 // pred_fallthru
          _
      $region32: #{conv_block_forward.1} parent=5 // pred_fallthru
        _
      %p414 = scmp.le.s32.totalorder 2, %s12
      // Predicated region
      $region37: #{conv_block_forward.1} parent=5 // pred_check
        %p415 = pneg %p414
      $region38: #{conv_block_forward.1} parent=5 // pred_check_branch
        %417 = sbr.rel (%p415) target = $region40
      $region39: #{conv_block_forward.1} parent=5 // pred_region
        %s418 = ssub.s32 %s12, 2
        // Predicated region
        $region41: #{conv_block_forward.1} parent=39 // pred_check
          %p419 = pneg %p133
        $region42: #{conv_block_forward.1} parent=39 // pred_check_branch
          %421 = sbr.rel (%p419) target = $region44
        $region43: #{conv_block_forward.1} parent=39 // pred_region
          %s422 = sand.u32 %s118, 1
          %s423 = scalar_lea.sflag [#allocation3], %s422
          %s424 = sand.u32 %s118, 1
          %s425 = smul.addr %s424, 8
          %s426 = scalar_lea.vmem [#allocation2], %s425
          %427 = dma.done %s423, 128
        $region44: #{conv_block_forward.1} parent=39 // pred_fallthru
          _
      $region40: #{conv_block_forward.1} parent=5 // pred_fallthru
        _
    $region6: #{conv_block_forward.1} parent=1 // loop_footer
      %s16 = sadd.s32 1, %s12
    $region7: #{conv_block_forward.1} parent=1 // loop_footer_branch
      %11 = sbr.rel target = $region3
    $region8: #{conv_block_forward.1} parent=1 // loop_exit
      _
    %428 = vsyncpa [#allocation3], 1
    %s429 = scalar_lea.sflag [#allocation3], 1
    %430 = vsyncpa %s429, 1

</llo_original>
